<compile_context>
chip_gen: v6e
topology: v6e:2x2x1
jax: 0.10.0
libtpu: 0.0.40
codegen_flags: <defaults>
</compile_context>

<pallas_src>
import numpy as np
import jax
import jax.numpy as jnp
from jax import lax
from jax.experimental import pallas as pl
from jax.experimental.pallas import tpu as pltpu

NEG_MASK = -1000000.0   # scaled_w[mask.bool()] = -1000000.0
NEG_SKIP = -100000.0    # scaled_w[:, 0]        = -100000.0


def _round_up(x, m):
    return ((x + m - 1) // m) * m


def _msvv_kernel(w_ref, orig_ref, sel_ref, neg_size_ref, budget_ref):
    """One grid step == one (batch block, block of TV online vertices).

    w_ref        : (TV, TB, UP)  bids for TV consecutive online vertices
    orig_ref     : (TB, UP)      original budgets (padded cols/rows = 1)
    sel_ref      : (TB, TV)      selected offline node per vertex (lane-dense)
    neg_size_ref : (TB, 1)       -total matched size (written on last V block)
    budget_ref   : (TB, UP)      VMEM scratch: remaining budgets across V blocks
    """
    vblk = pl.program_id(1)
    TV, TB, UP = w_ref.shape

    orig = orig_ref[...]

    @pl.when(vblk == 0)
    def _init():
        budget_ref[...] = orig

    # Loop-invariant vregs hoisted out of the per-vertex loop.
    inv_orig = 1.0 / orig
    col = lax.broadcasted_iota(jnp.int32, (TB, UP), 1)
    is_skip = col == 0
    not_skip = jnp.logical_not(is_skip)
    tcol = lax.broadcasted_iota(jnp.int32, (TB, TV), 1)

    def body(t, carry):
        curr, sel_acc = carry
        w = w_ref[t]                                   # (TB, UP)

        # offline node not selectable if no edge (bid == 0) or bid > remaining budget
        mask = jnp.logical_or(w <= 0.0, w > curr)

        # scaled_w = w * (1 - exp(-(curr_budget / orig_budget)))
        scaled = w * (1.0 - jnp.exp(-(curr * inv_orig)))
        scaled = jnp.where(mask, NEG_MASK, scaled)
        scaled = jnp.where(is_skip, NEG_SKIP, scaled)

        # deterministic first-max argmax (matches np.argmax tie-break)
        max_val = jnp.max(scaled, axis=-1, keepdims=True)
        cand = jnp.where(scaled == max_val, col, UP)
        selected = jnp.min(cand, axis=-1, keepdims=True)     # (TB, 1) int32

        hit = jnp.logical_and(col == selected, not_skip)
        curr = jnp.where(hit, curr - w, curr)
        sel_acc = jnp.where(tcol == t, selected, sel_acc)
        return curr, sel_acc

    # Scale unroll down as TB grows to keep carried budget/sel/temps in vregs.
    unroll = 8 if TB <= 8 else (4 if TB <= 32 else 2)
    budget, sel_acc = lax.fori_loop(
        0, TV, body,
        (budget_ref[...], jnp.zeros((TB, TV), jnp.int32)),
        unroll=unroll)

    budget_ref[...] = budget
    sel_ref[...] = sel_acc

    @pl.when(vblk == pl.num_programs(1) - 1)
    def _final():
        # total matched size == total budget spent (pads/skip column never change)
        neg_size_ref[...] = -jnp.sum(orig - budget, axis=-1, keepdims=True)


def msvv_forward(weights, orig_budget, *, tv_max=128, tb_max=128):
    """weights: (V, B, U+1) f32, orig_budget: (B, U+1) f32 (slot 0 dummy = 1).

    Returns (-size, sequences, None) matching the PyTorch forward:
      -size     : (B,)  negative total matched weight
      sequences : (B, V) int32 selected offline node per online step
    """
    V, B, Up1 = weights.shape

    UP = _round_up(Up1, 128)
    TV = tv_max if V >= tv_max else V          # TV < 128 only for a single V block
    V_pad = _round_up(V, TV)

    # Batch tile: as wide as VMEM comfortably allows (double-buffered weight block
    # kept ~<= 12 MiB so it fits v5e's 16 MiB scoped default).  On v7x, a smaller
    # tb_max keeping grid_b >= 2 lets megacore split the batch across both TCs.
    vmem_budget = 12 * 1024 * 1024
    tb_cap = max(8, (vmem_budget // (2 * TV * UP * 4)) // 8 * 8)
    TB = max(8, min(_round_up(B, 8), tb_cap, tb_max) // 8 * 8)
    B_pad = _round_up(B, TB)

    # Pad: bids -> 0 (masked -> skip chosen, no budget change); budgets -> 1 (no 0/0).
    w_pad = jnp.zeros((V_pad, B_pad, UP), weights.dtype).at[:V, :B, :Up1].set(weights)
    orig_pad = jnp.ones((B_pad, UP), orig_budget.dtype).at[:B, :Up1].set(orig_budget)

    grid_b = B_pad // TB
    grid_v = V_pad // TV

    sel, neg_size = pl.pallas_call(
        _msvv_kernel,
        out_shape=(
            jax.ShapeDtypeStruct((B_pad, V_pad), jnp.int32),
            jax.ShapeDtypeStruct((B_pad, 1), jnp.float32),
        ),
        grid_spec=pltpu.PrefetchScalarGridSpec(
            num_scalar_prefetch=0,
            grid=(grid_b, grid_v),
            in_specs=[
                pl.BlockSpec((TV, TB, UP), lambda b, v: (v, b, 0)),
                pl.BlockSpec((TB, UP), lambda b, v: (b, 0)),
            ],
            out_specs=(
                pl.BlockSpec((TB, TV), lambda b, v: (b, v)),
                pl.BlockSpec((TB, 1), lambda b, v: (b, 0)),
            ),
            scratch_shapes=[
                pltpu.VMEM((TB, UP), jnp.float32),   # remaining budgets
            ],
        ),
        compiler_params=pltpu.CompilerParams(
            # batch blocks are independent (megacore may split them); the V axis
            # carries the sequential decode state in scratch.
            dimension_semantics=("parallel", "arbitrary"),
            vmem_limit_bytes=32 * 1024 * 1024,
        ),
    )(w_pad, orig_pad)

    sequences = sel[:B, :V]             # (B, V) batch-major, lane-dense output
    return neg_size[:B, 0], sequences, None


def _reference(weights, orig_budget):
    """Numpy reference of the same MSVV decode loop (f32, same formula)."""
    w_all = np.asarray(weights, dtype=np.float32)
    orig = np.asarray(orig_budget, dtype=np.float32)
    V, B, Up1 = w_all.shape
    curr = orig.copy()
    inv_orig = np.float32(1.0) / orig
    size = np.zeros((B,), dtype=np.float32)
    seqs = np.zeros((B, V), dtype=np.int32)
    for v in range(V):
        w = w_all[v]
        mask = (w <= 0.0) | (w > curr)
        scaled = w * (np.float32(1.0) - np.exp(-(curr * inv_orig)))
        scaled[mask] = NEG_MASK
        scaled[:, 0] = NEG_SKIP
        sel = np.argmax(scaled, axis=-1)
        for b in range(B):
            u = int(sel[b])
            if u != 0:
                curr[b, u] -= w[b, u]
                size[b] += w[b, u]
            seqs[b, v] = u
    return -size, seqs


if __name__ == "__main__":
    B, U, V = 2, 4, 8          # batch, offline nodes (u_size), online nodes (v_size)
    Up1 = U + 1

    key = jax.random.PRNGKey(0)
    k_w, k_drop, k_b = jax.random.split(key, 3)

    # bids for each online arrival: (V, B, U+1); slot 0 (skip) has bid 0
    bids = jax.random.uniform(k_w, (V, B, Up1), dtype=jnp.float32, minval=0.1, maxval=1.0)
    edge = (jax.random.uniform(k_drop, (V, B, Up1)) > 0.3).astype(jnp.float32)
    weights = bids * edge
    weights = weights.at[:, :, 0].set(0.0)

    # original budgets: (B, U+1); slot 0 is a dummy of 1.0
    orig_budget = jax.random.uniform(k_b, (B, Up1), dtype=jnp.float32, minval=1.0, maxval=3.0)
    orig_budget = orig_budget.at[:, 0].set(1.0)

    neg_size, sequences, _ = msvv_forward(weights, orig_budget)
    jax.block_until_ready((neg_size, sequences))

    ref_neg_size, ref_seqs = _reference(weights, orig_budget)
    np.testing.assert_array_equal(np.asarray(sequences), ref_seqs)
    np.testing.assert_allclose(np.asarray(neg_size), ref_neg_size, rtol=1e-4, atol=1e-4)

    print("KERNEL_OK")
</pallas_src>

<mosaic_0001>
module attributes {stable_mosaic.version = 11 : i64} {
  func.func @_msvv_kernel(%arg0: i32, %arg1: i32, %arg2: memref<8x8x128xf32, #tpu.memory_space<vmem>>, %arg3: memref<8x128xf32, #tpu.memory_space<vmem>>, %arg4: memref<8x8xi32, #tpu.memory_space<vmem>>, %arg5: memref<8x1xf32, #tpu.memory_space<vmem>>, %arg6: memref<8x128xf32, #tpu.memory_space<vmem>>) attributes {dimension_semantics = [#tpu.dimension_semantics<parallel>, #tpu.dimension_semantics<arbitrary>], iteration_bounds = array<i64: 1, 1>, scalar_prefetch = 0 : i64, scratch_operands = 1 : i64, tpu.core_type = #tpu.core_type<tc>, window_params = [{transform_indices = @transform_0, window_bounds = array<i64: 8, 8, 128>}, {transform_indices = @transform_1, window_bounds = array<i64: 8, 128>}, {transform_indices = @transform_2, window_bounds = array<i64: 8, 8>}, {transform_indices = @transform_3, window_bounds = array<i64: 8, 1>}]} {
    %c0 = arith.constant 0 : index
    %c0_0 = arith.constant 0 : index
    %0 = vector.load %arg3[%c0, %c0_0] : memref<8x128xf32, #tpu.memory_space<vmem>>, vector<8x128xf32>
    %c0_i32 = arith.constant 0 : i32
    %1 = arith.cmpi eq, %arg1, %c0_i32 : i32
    %2 = arith.extui %1 : i1 to i32
    %c0_i32_1 = arith.constant 0 : i32
    %3 = arith.cmpi ne, %2, %c0_i32_1 : i32
    scf.if %3 {
      %c0_93 = arith.constant 0 : index
      %c0_94 = arith.constant 0 : index
      %306 = vector.load %arg6[%c0_93, %c0_94] : memref<8x128xf32, #tpu.memory_space<vmem>>, vector<8x128xf32>
      tpu.vector_store %arg6[%c0_93, %c0_94], %0 {strides = array<i32>} : memref<8x128xf32, #tpu.memory_space<vmem>>, vector<8x128xf32>,
    } else {
    }
    %cst = arith.constant 1.000000e+00 : f32
    %4 = vector.broadcast %cst : f32 to vector<8x128xf32>
    %5 = arith.divf %4, %0 : vector<8x128xf32>
    %6 = tpu.iota {dimensions = array<i32: 1>} : vector<8x128xi32>
    %c0_i32_2 = arith.constant 0 : i32
    %7 = vector.broadcast %c0_i32_2 : i32 to vector<8x128xi32>
    %8 = arith.cmpi eq, %6, %7 : vector<8x128xi32>
    %cst_3 = arith.constant dense<true> : vector<8x128xi1>
    %9 = arith.xori %8, %cst_3 : vector<8x128xi1>
    %10 = tpu.iota {dimensions = array<i32: 1>} : vector<8x8xi32>
    %c0_4 = arith.constant 0 : index
    %c0_5 = arith.constant 0 : index
    %11 = vector.load %arg6[%c0_4, %c0_5] : memref<8x128xf32, #tpu.memory_space<vmem>>, vector<8x128xf32>
    %c0_i32_6 = arith.constant 0 : i32
    %12 = vector.broadcast %c0_i32_6 : i32 to vector<8x8xi32>
    %c0_i32_7 = arith.constant 0 : i32
    %13 = arith.index_cast %c0_i32_7 : i32 to index
    %c0_8 = arith.constant 0 : index
    %c0_9 = arith.constant 0 : index
    %14 = vector.load %arg2[%13, %c0_8, %c0_9] : memref<8x8x128xf32, #tpu.memory_space<vmem>>, vector<1x8x128xf32>
    %15 = vector.shape_cast %14 : vector<1x8x128xf32> to vector<8x128xf32>
    %cst_10 = arith.constant 0.000000e+00 : f32
    %16 = vector.broadcast %cst_10 : f32 to vector<8x128xf32>
    %17 = arith.cmpf ole, %15, %16 : vector<8x128xf32>
    %18 = arith.cmpf ogt, %15, %11 : vector<8x128xf32>
    %19 = arith.ori %17, %18 : vector<8x128xi1>
    %20 = arith.mulf %11, %5 : vector<8x128xf32>
    %cst_11 = arith.constant 0.000000e+00 : f32
    %21 = vector.broadcast %cst_11 : f32 to vector<8x128xf32>
    %22 = arith.subf %21, %20 : vector<8x128xf32>
    %23 = math.exp %22 : vector<8x128xf32>
    %cst_12 = arith.constant 1.000000e+00 : f32
    %24 = vector.broadcast %cst_12 : f32 to vector<8x128xf32>
    %25 = arith.subf %24, %23 : vector<8x128xf32>
    %26 = arith.mulf %15, %25 : vector<8x128xf32>
    %cst_13 = arith.constant -1.000000e+06 : f32
    %27 = vector.broadcast %cst_13 : f32 to vector<8x128xf32>
    %28 = arith.select %19, %27, %26 : vector<8x128xi1>, vector<8x128xf32>
    %cst_14 = arith.constant -1.000000e+05 : f32
    %29 = vector.broadcast %cst_14 : f32 to vector<8x128xf32>
    %30 = arith.select %8, %29, %28 : vector<8x128xi1>, vector<8x128xf32>
    %cst_15 = arith.constant dense<0xFF800000> : vector<8xf32>
    %31 = vector.multi_reduction <maximumf>, %30, %cst_15 [1] : vector<8x128xf32> to vector<8xf32>
    %32 = vector.shape_cast %31 : vector<8xf32> to vector<8x1xf32>
    %33 = vector.broadcast %32 : vector<8x1xf32> to vector<8x128xf32>
    %34 = arith.cmpf oeq, %30, %33 : vector<8x128xf32>
    %c128_i32 = arith.constant 128 : i32
    %35 = vector.broadcast %c128_i32 : i32 to vector<8x128xi32>
    %36 = arith.select %34, %6, %35 : vector<8x128xi1>, vector<8x128xi32>
    %cst_16 = arith.constant dense<2147483647> : vector<8xi32>
    %37 = vector.multi_reduction <minsi>, %36, %cst_16 [1] : vector<8x128xi32> to vector<8xi32>
    %38 = vector.shape_cast %37 : vector<8xi32> to vector<8x1xi32>
    %39 = vector.broadcast %38 : vector<8x1xi32> to vector<8x128xi32>
    %40 = arith.cmpi eq, %6, %39 : vector<8x128xi32>
    %41 = arith.andi %40, %9 : vector<8x128xi1>
    %42 = arith.subf %11, %15 : vector<8x128xf32>
    %43 = arith.select %41, %42, %11 : vector<8x128xi1>, vector<8x128xf32>
    %44 = vector.broadcast %c0_i32_7 : i32 to vector<8x8xi32>
    %45 = arith.cmpi eq, %10, %44 : vector<8x8xi32>
    %46 = vector.shape_cast %38 : vector<8x1xi32> to vector<8x1xi32>
    %47 = vector.broadcast %46 : vector<8x1xi32> to vector<8x8xi32>
    %48 = arith.select %45, %47, %12 : vector<8x8xi1>, vector<8x8xi32>
    %c1_i32 = arith.constant 1 : i32
    %49 = arith.index_cast %c1_i32 : i32 to index
    %c0_17 = arith.constant 0 : index
    %c0_18 = arith.constant 0 : index
    %50 = vector.load %arg2[%49, %c0_17, %c0_18] : memref<8x8x128xf32, #tpu.memory_space<vmem>>, vector<1x8x128xf32>
    %51 = vector.shape_cast %50 : vector<1x8x128xf32> to vector<8x128xf32>
    %cst_19 = arith.constant 0.000000e+00 : f32
    %52 = vector.broadcast %cst_19 : f32 to vector<8x128xf32>
    %53 = arith.cmpf ole, %51, %52 : vector<8x128xf32>
    %54 = arith.cmpf ogt, %51, %43 : vector<8x128xf32>
    %55 = arith.ori %53, %54 : vector<8x128xi1>
    %56 = arith.mulf %43, %5 : vector<8x128xf32>
    %cst_20 = arith.constant 0.000000e+00 : f32
    %57 = vector.broadcast %cst_20 : f32 to vector<8x128xf32>
    %58 = arith.subf %57, %56 : vector<8x128xf32>
    %59 = math.exp %58 : vector<8x128xf32>
    %cst_21 = arith.constant 1.000000e+00 : f32
    %60 = vector.broadcast %cst_21 : f32 to vector<8x128xf32>
    %61 = arith.subf %60, %59 : vector<8x128xf32>
    %62 = arith.mulf %51, %61 : vector<8x128xf32>
    %cst_22 = arith.constant -1.000000e+06 : f32
    %63 = vector.broadcast %cst_22 : f32 to vector<8x128xf32>
    %64 = arith.select %55, %63, %62 : vector<8x128xi1>, vector<8x128xf32>
    %cst_23 = arith.constant -1.000000e+05 : f32
    %65 = vector.broadcast %cst_23 : f32 to vector<8x128xf32>
    %66 = arith.select %8, %65, %64 : vector<8x128xi1>, vector<8x128xf32>
    %cst_24 = arith.constant dense<0xFF800000> : vector<8xf32>
    %67 = vector.multi_reduction <maximumf>, %66, %cst_24 [1] : vector<8x128xf32> to vector<8xf32>
    %68 = vector.shape_cast %67 : vector<8xf32> to vector<8x1xf32>
    %69 = vector.broadcast %68 : vector<8x1xf32> to vector<8x128xf32>
    %70 = arith.cmpf oeq, %66, %69 : vector<8x128xf32>
    %c128_i32_25 = arith.constant 128 : i32
    %71 = vector.broadcast %c128_i32_25 : i32 to vector<8x128xi32>
    %72 = arith.select %70, %6, %71 : vector<8x128xi1>, vector<8x128xi32>
    %cst_26 = arith.constant dense<2147483647> : vector<8xi32>
    %73 = vector.multi_reduction <minsi>, %72, %cst_26 [1] : vector<8x128xi32> to vector<8xi32>
    %74 = vector.shape_cast %73 : vector<8xi32> to vector<8x1xi32>
    %75 = vector.broadcast %74 : vector<8x1xi32> to vector<8x128xi32>
    %76 = arith.cmpi eq, %6, %75 : vector<8x128xi32>
    %77 = arith.andi %76, %9 : vector<8x128xi1>
    %78 = arith.subf %43, %51 : vector<8x128xf32>
    %79 = arith.select %77, %78, %43 : vector<8x128xi1>, vector<8x128xf32>
    %80 = vector.broadcast %c1_i32 : i32 to vector<8x8xi32>
    %81 = arith.cmpi eq, %10, %80 : vector<8x8xi32>
    %82 = vector.shape_cast %74 : vector<8x1xi32> to vector<8x1xi32>
    %83 = vector.broadcast %82 : vector<8x1xi32> to vector<8x8xi32>
    %84 = arith.select %81, %83, %48 : vector<8x8xi1>, vector<8x8xi32>
    %c2_i32 = arith.constant 2 : i32
    %85 = arith.index_cast %c2_i32 : i32 to index
    %c0_27 = arith.constant 0 : index
    %c0_28 = arith.constant 0 : index
    %86 = vector.load %arg2[%85, %c0_27, %c0_28] : memref<8x8x128xf32, #tpu.memory_space<vmem>>, vector<1x8x128xf32>
    %87 = vector.shape_cast %86 : vector<1x8x128xf32> to vector<8x128xf32>
    %cst_29 = arith.constant 0.000000e+00 : f32
    %88 = vector.broadcast %cst_29 : f32 to vector<8x128xf32>
    %89 = arith.cmpf ole, %87, %88 : vector<8x128xf32>
    %90 = arith.cmpf ogt, %87, %79 : vector<8x128xf32>
    %91 = arith.ori %89, %90 : vector<8x128xi1>
    %92 = arith.mulf %79, %5 : vector<8x128xf32>
    %cst_30 = arith.constant 0.000000e+00 : f32
    %93 = vector.broadcast %cst_30 : f32 to vector<8x128xf32>
    %94 = arith.subf %93, %92 : vector<8x128xf32>
    %95 = math.exp %94 : vector<8x128xf32>
    %cst_31 = arith.constant 1.000000e+00 : f32
    %96 = vector.broadcast %cst_31 : f32 to vector<8x128xf32>
    %97 = arith.subf %96, %95 : vector<8x128xf32>
    %98 = arith.mulf %87, %97 : vector<8x128xf32>
    %cst_32 = arith.constant -1.000000e+06 : f32
    %99 = vector.broadcast %cst_32 : f32 to vector<8x128xf32>
    %100 = arith.select %91, %99, %98 : vector<8x128xi1>, vector<8x128xf32>
    %cst_33 = arith.constant -1.000000e+05 : f32
    %101 = vector.broadcast %cst_33 : f32 to vector<8x128xf32>
    %102 = arith.select %8, %101, %100 : vector<8x128xi1>, vector<8x128xf32>
    %cst_34 = arith.constant dense<0xFF800000> : vector<8xf32>
    %103 = vector.multi_reduction <maximumf>, %102, %cst_34 [1] : vector<8x128xf32> to vector<8xf32>
    %104 = vector.shape_cast %103 : vector<8xf32> to vector<8x1xf32>
    %105 = vector.broadcast %104 : vector<8x1xf32> to vector<8x128xf32>
    %106 = arith.cmpf oeq, %102, %105 : vector<8x128xf32>
    %c128_i32_35 = arith.constant 128 : i32
    %107 = vector.broadcast %c128_i32_35 : i32 to vector<8x128xi32>
    %108 = arith.select %106, %6, %107 : vector<8x128xi1>, vector<8x128xi32>
    %cst_36 = arith.constant dense<2147483647> : vector<8xi32>
    %109 = vector.multi_reduction <minsi>, %108, %cst_36 [1] : vector<8x128xi32> to vector<8xi32>
    %110 = vector.shape_cast %109 : vector<8xi32> to vector<8x1xi32>
    %111 = vector.broadcast %110 : vector<8x1xi32> to vector<8x128xi32>
    %112 = arith.cmpi eq, %6, %111 : vector<8x128xi32>
    %113 = arith.andi %112, %9 : vector<8x128xi1>
    %114 = arith.subf %79, %87 : vector<8x128xf32>
    %115 = arith.select %113, %114, %79 : vector<8x128xi1>, vector<8x128xf32>
    %116 = vector.broadcast %c2_i32 : i32 to vector<8x8xi32>
    %117 = arith.cmpi eq, %10, %116 : vector<8x8xi32>
    %118 = vector.shape_cast %110 : vector<8x1xi32> to vector<8x1xi32>
    %119 = vector.broadcast %118 : vector<8x1xi32> to vector<8x8xi32>
    %120 = arith.select %117, %119, %84 : vector<8x8xi1>, vector<8x8xi32>
    %c3_i32 = arith.constant 3 : i32
    %121 = arith.index_cast %c3_i32 : i32 to index
    %c0_37 = arith.constant 0 : index
    %c0_38 = arith.constant 0 : index
    %122 = vector.load %arg2[%121, %c0_37, %c0_38] : memref<8x8x128xf32, #tpu.memory_space<vmem>>, vector<1x8x128xf32>
    %123 = vector.shape_cast %122 : vector<1x8x128xf32> to vector<8x128xf32>
    %cst_39 = arith.constant 0.000000e+00 : f32
    %124 = vector.broadcast %cst_39 : f32 to vector<8x128xf32>
    %125 = arith.cmpf ole, %123, %124 : vector<8x128xf32>
    %126 = arith.cmpf ogt, %123, %115 : vector<8x128xf32>
    %127 = arith.ori %125, %126 : vector<8x128xi1>
    %128 = arith.mulf %115, %5 : vector<8x128xf32>
    %cst_40 = arith.constant 0.000000e+00 : f32
    %129 = vector.broadcast %cst_40 : f32 to vector<8x128xf32>
    %130 = arith.subf %129, %128 : vector<8x128xf32>
    %131 = math.exp %130 : vector<8x128xf32>
    %cst_41 = arith.constant 1.000000e+00 : f32
    %132 = vector.broadcast %cst_41 : f32 to vector<8x128xf32>
    %133 = arith.subf %132, %131 : vector<8x128xf32>
    %134 = arith.mulf %123, %133 : vector<8x128xf32>
    %cst_42 = arith.constant -1.000000e+06 : f32
    %135 = vector.broadcast %cst_42 : f32 to vector<8x128xf32>
    %136 = arith.select %127, %135, %134 : vector<8x128xi1>, vector<8x128xf32>
    %cst_43 = arith.constant -1.000000e+05 : f32
    %137 = vector.broadcast %cst_43 : f32 to vector<8x128xf32>
    %138 = arith.select %8, %137, %136 : vector<8x128xi1>, vector<8x128xf32>
    %cst_44 = arith.constant dense<0xFF800000> : vector<8xf32>
    %139 = vector.multi_reduction <maximumf>, %138, %cst_44 [1] : vector<8x128xf32> to vector<8xf32>
    %140 = vector.shape_cast %139 : vector<8xf32> to vector<8x1xf32>
    %141 = vector.broadcast %140 : vector<8x1xf32> to vector<8x128xf32>
    %142 = arith.cmpf oeq, %138, %141 : vector<8x128xf32>
    %c128_i32_45 = arith.constant 128 : i32
    %143 = vector.broadcast %c128_i32_45 : i32 to vector<8x128xi32>
    %144 = arith.select %142, %6, %143 : vector<8x128xi1>, vector<8x128xi32>
    %cst_46 = arith.constant dense<2147483647> : vector<8xi32>
    %145 = vector.multi_reduction <minsi>, %144, %cst_46 [1] : vector<8x128xi32> to vector<8xi32>
    %146 = vector.shape_cast %145 : vector<8xi32> to vector<8x1xi32>
    %147 = vector.broadcast %146 : vector<8x1xi32> to vector<8x128xi32>
    %148 = arith.cmpi eq, %6, %147 : vector<8x128xi32>
    %149 = arith.andi %148, %9 : vector<8x128xi1>
    %150 = arith.subf %115, %123 : vector<8x128xf32>
    %151 = arith.select %149, %150, %115 : vector<8x128xi1>, vector<8x128xf32>
    %152 = vector.broadcast %c3_i32 : i32 to vector<8x8xi32>
    %153 = arith.cmpi eq, %10, %152 : vector<8x8xi32>
    %154 = vector.shape_cast %146 : vector<8x1xi32> to vector<8x1xi32>
    %155 = vector.broadcast %154 : vector<8x1xi32> to vector<8x8xi32>
    %156 = arith.select %153, %155, %120 : vector<8x8xi1>, vector<8x8xi32>
    %c4_i32 = arith.constant 4 : i32
    %157 = arith.index_cast %c4_i32 : i32 to index
    %c0_47 = arith.constant 0 : index
    %c0_48 = arith.constant 0 : index
    %158 = vector.load %arg2[%157, %c0_47, %c0_48] : memref<8x8x128xf32, #tpu.memory_space<vmem>>, vector<1x8x128xf32>
    %159 = vector.shape_cast %158 : vector<1x8x128xf32> to vector<8x128xf32>
    %cst_49 = arith.constant 0.000000e+00 : f32
    %160 = vector.broadcast %cst_49 : f32 to vector<8x128xf32>
    %161 = arith.cmpf ole, %159, %160 : vector<8x128xf32>
    %162 = arith.cmpf ogt, %159, %151 : vector<8x128xf32>
    %163 = arith.ori %161, %162 : vector<8x128xi1>
    %164 = arith.mulf %151, %5 : vector<8x128xf32>
    %cst_50 = arith.constant 0.000000e+00 : f32
    %165 = vector.broadcast %cst_50 : f32 to vector<8x128xf32>
    %166 = arith.subf %165, %164 : vector<8x128xf32>
    %167 = math.exp %166 : vector<8x128xf32>
    %cst_51 = arith.constant 1.000000e+00 : f32
    %168 = vector.broadcast %cst_51 : f32 to vector<8x128xf32>
    %169 = arith.subf %168, %167 : vector<8x128xf32>
    %170 = arith.mulf %159, %169 : vector<8x128xf32>
    %cst_52 = arith.constant -1.000000e+06 : f32
    %171 = vector.broadcast %cst_52 : f32 to vector<8x128xf32>
    %172 = arith.select %163, %171, %170 : vector<8x128xi1>, vector<8x128xf32>
    %cst_53 = arith.constant -1.000000e+05 : f32
    %173 = vector.broadcast %cst_53 : f32 to vector<8x128xf32>
    %174 = arith.select %8, %173, %172 : vector<8x128xi1>, vector<8x128xf32>
    %cst_54 = arith.constant dense<0xFF800000> : vector<8xf32>
    %175 = vector.multi_reduction <maximumf>, %174, %cst_54 [1] : vector<8x128xf32> to vector<8xf32>
    %176 = vector.shape_cast %175 : vector<8xf32> to vector<8x1xf32>
    %177 = vector.broadcast %176 : vector<8x1xf32> to vector<8x128xf32>
    %178 = arith.cmpf oeq, %174, %177 : vector<8x128xf32>
    %c128_i32_55 = arith.constant 128 : i32
    %179 = vector.broadcast %c128_i32_55 : i32 to vector<8x128xi32>
    %180 = arith.select %178, %6, %179 : vector<8x128xi1>, vector<8x128xi32>
    %cst_56 = arith.constant dense<2147483647> : vector<8xi32>
    %181 = vector.multi_reduction <minsi>, %180, %cst_56 [1] : vector<8x128xi32> to vector<8xi32>
    %182 = vector.shape_cast %181 : vector<8xi32> to vector<8x1xi32>
    %183 = vector.broadcast %182 : vector<8x1xi32> to vector<8x128xi32>
    %184 = arith.cmpi eq, %6, %183 : vector<8x128xi32>
    %185 = arith.andi %184, %9 : vector<8x128xi1>
    %186 = arith.subf %151, %159 : vector<8x128xf32>
    %187 = arith.select %185, %186, %151 : vector<8x128xi1>, vector<8x128xf32>
    %188 = vector.broadcast %c4_i32 : i32 to vector<8x8xi32>
    %189 = arith.cmpi eq, %10, %188 : vector<8x8xi32>
    %190 = vector.shape_cast %182 : vector<8x1xi32> to vector<8x1xi32>
    %191 = vector.broadcast %190 : vector<8x1xi32> to vector<8x8xi32>
    %192 = arith.select %189, %191, %156 : vector<8x8xi1>, vector<8x8xi32>
    %c5_i32 = arith.constant 5 : i32
    %193 = arith.index_cast %c5_i32 : i32 to index
    %c0_57 = arith.constant 0 : index
    %c0_58 = arith.constant 0 : index
    %194 = vector.load %arg2[%193, %c0_57, %c0_58] : memref<8x8x128xf32, #tpu.memory_space<vmem>>, vector<1x8x128xf32>
    %195 = vector.shape_cast %194 : vector<1x8x128xf32> to vector<8x128xf32>
    %cst_59 = arith.constant 0.000000e+00 : f32
    %196 = vector.broadcast %cst_59 : f32 to vector<8x128xf32>
    %197 = arith.cmpf ole, %195, %196 : vector<8x128xf32>
    %198 = arith.cmpf ogt, %195, %187 : vector<8x128xf32>
    %199 = arith.ori %197, %198 : vector<8x128xi1>
    %200 = arith.mulf %187, %5 : vector<8x128xf32>
    %cst_60 = arith.constant 0.000000e+00 : f32
    %201 = vector.broadcast %cst_60 : f32 to vector<8x128xf32>
    %202 = arith.subf %201, %200 : vector<8x128xf32>
    %203 = math.exp %202 : vector<8x128xf32>
    %cst_61 = arith.constant 1.000000e+00 : f32
    %204 = vector.broadcast %cst_61 : f32 to vector<8x128xf32>
    %205 = arith.subf %204, %203 : vector<8x128xf32>
    %206 = arith.mulf %195, %205 : vector<8x128xf32>
    %cst_62 = arith.constant -1.000000e+06 : f32
    %207 = vector.broadcast %cst_62 : f32 to vector<8x128xf32>
    %208 = arith.select %199, %207, %206 : vector<8x128xi1>, vector<8x128xf32>
    %cst_63 = arith.constant -1.000000e+05 : f32
    %209 = vector.broadcast %cst_63 : f32 to vector<8x128xf32>
    %210 = arith.select %8, %209, %208 : vector<8x128xi1>, vector<8x128xf32>
    %cst_64 = arith.constant dense<0xFF800000> : vector<8xf32>
    %211 = vector.multi_reduction <maximumf>, %210, %cst_64 [1] : vector<8x128xf32> to vector<8xf32>
    %212 = vector.shape_cast %211 : vector<8xf32> to vector<8x1xf32>
    %213 = vector.broadcast %212 : vector<8x1xf32> to vector<8x128xf32>
    %214 = arith.cmpf oeq, %210, %213 : vector<8x128xf32>
    %c128_i32_65 = arith.constant 128 : i32
    %215 = vector.broadcast %c128_i32_65 : i32 to vector<8x128xi32>
    %216 = arith.select %214, %6, %215 : vector<8x128xi1>, vector<8x128xi32>
    %cst_66 = arith.constant dense<2147483647> : vector<8xi32>
    %217 = vector.multi_reduction <minsi>, %216, %cst_66 [1] : vector<8x128xi32> to vector<8xi32>
    %218 = vector.shape_cast %217 : vector<8xi32> to vector<8x1xi32>
    %219 = vector.broadcast %218 : vector<8x1xi32> to vector<8x128xi32>
    %220 = arith.cmpi eq, %6, %219 : vector<8x128xi32>
    %221 = arith.andi %220, %9 : vector<8x128xi1>
    %222 = arith.subf %187, %195 : vector<8x128xf32>
    %223 = arith.select %221, %222, %187 : vector<8x128xi1>, vector<8x128xf32>
    %224 = vector.broadcast %c5_i32 : i32 to vector<8x8xi32>
    %225 = arith.cmpi eq, %10, %224 : vector<8x8xi32>
    %226 = vector.shape_cast %218 : vector<8x1xi32> to vector<8x1xi32>
    %227 = vector.broadcast %226 : vector<8x1xi32> to vector<8x8xi32>
    %228 = arith.select %225, %227, %192 : vector<8x8xi1>, vector<8x8xi32>
    %c6_i32 = arith.constant 6 : i32
    %229 = arith.index_cast %c6_i32 : i32 to index
    %c0_67 = arith.constant 0 : index
    %c0_68 = arith.constant 0 : index
    %230 = vector.load %arg2[%229, %c0_67, %c0_68] : memref<8x8x128xf32, #tpu.memory_space<vmem>>, vector<1x8x128xf32>
    %231 = vector.shape_cast %230 : vector<1x8x128xf32> to vector<8x128xf32>
    %cst_69 = arith.constant 0.000000e+00 : f32
    %232 = vector.broadcast %cst_69 : f32 to vector<8x128xf32>
    %233 = arith.cmpf ole, %231, %232 : vector<8x128xf32>
    %234 = arith.cmpf ogt, %231, %223 : vector<8x128xf32>
    %235 = arith.ori %233, %234 : vector<8x128xi1>
    %236 = arith.mulf %223, %5 : vector<8x128xf32>
    %cst_70 = arith.constant 0.000000e+00 : f32
    %237 = vector.broadcast %cst_70 : f32 to vector<8x128xf32>
    %238 = arith.subf %237, %236 : vector<8x128xf32>
    %239 = math.exp %238 : vector<8x128xf32>
    %cst_71 = arith.constant 1.000000e+00 : f32
    %240 = vector.broadcast %cst_71 : f32 to vector<8x128xf32>
    %241 = arith.subf %240, %239 : vector<8x128xf32>
    %242 = arith.mulf %231, %241 : vector<8x128xf32>
    %cst_72 = arith.constant -1.000000e+06 : f32
    %243 = vector.broadcast %cst_72 : f32 to vector<8x128xf32>
    %244 = arith.select %235, %243, %242 : vector<8x128xi1>, vector<8x128xf32>
    %cst_73 = arith.constant -1.000000e+05 : f32
    %245 = vector.broadcast %cst_73 : f32 to vector<8x128xf32>
    %246 = arith.select %8, %245, %244 : vector<8x128xi1>, vector<8x128xf32>
    %cst_74 = arith.constant dense<0xFF800000> : vector<8xf32>
    %247 = vector.multi_reduction <maximumf>, %246, %cst_74 [1] : vector<8x128xf32> to vector<8xf32>
    %248 = vector.shape_cast %247 : vector<8xf32> to vector<8x1xf32>
    %249 = vector.broadcast %248 : vector<8x1xf32> to vector<8x128xf32>
    %250 = arith.cmpf oeq, %246, %249 : vector<8x128xf32>
    %c128_i32_75 = arith.constant 128 : i32
    %251 = vector.broadcast %c128_i32_75 : i32 to vector<8x128xi32>
    %252 = arith.select %250, %6, %251 : vector<8x128xi1>, vector<8x128xi32>
    %cst_76 = arith.constant dense<2147483647> : vector<8xi32>
    %253 = vector.multi_reduction <minsi>, %252, %cst_76 [1] : vector<8x128xi32> to vector<8xi32>
    %254 = vector.shape_cast %253 : vector<8xi32> to vector<8x1xi32>
    %255 = vector.broadcast %254 : vector<8x1xi32> to vector<8x128xi32>
    %256 = arith.cmpi eq, %6, %255 : vector<8x128xi32>
    %257 = arith.andi %256, %9 : vector<8x128xi1>
    %258 = arith.subf %223, %231 : vector<8x128xf32>
    %259 = arith.select %257, %258, %223 : vector<8x128xi1>, vector<8x128xf32>
    %260 = vector.broadcast %c6_i32 : i32 to vector<8x8xi32>
    %261 = arith.cmpi eq, %10, %260 : vector<8x8xi32>
    %262 = vector.shape_cast %254 : vector<8x1xi32> to vector<8x1xi32>
    %263 = vector.broadcast %262 : vector<8x1xi32> to vector<8x8xi32>
    %264 = arith.select %261, %263, %228 : vector<8x8xi1>, vector<8x8xi32>
    %c7_i32 = arith.constant 7 : i32
    %265 = arith.index_cast %c7_i32 : i32 to index
    %c0_77 = arith.constant 0 : index
    %c0_78 = arith.constant 0 : index
    %266 = vector.load %arg2[%265, %c0_77, %c0_78] : memref<8x8x128xf32, #tpu.memory_space<vmem>>, vector<1x8x128xf32>
    %267 = vector.shape_cast %266 : vector<1x8x128xf32> to vector<8x128xf32>
    %cst_79 = arith.constant 0.000000e+00 : f32
    %268 = vector.broadcast %cst_79 : f32 to vector<8x128xf32>
    %269 = arith.cmpf ole, %267, %268 : vector<8x128xf32>
    %270 = arith.cmpf ogt, %267, %259 : vector<8x128xf32>
    %271 = arith.ori %269, %270 : vector<8x128xi1>
    %272 = arith.mulf %259, %5 : vector<8x128xf32>
    %cst_80 = arith.constant 0.000000e+00 : f32
    %273 = vector.broadcast %cst_80 : f32 to vector<8x128xf32>
    %274 = arith.subf %273, %272 : vector<8x128xf32>
    %275 = math.exp %274 : vector<8x128xf32>
    %cst_81 = arith.constant 1.000000e+00 : f32
    %276 = vector.broadcast %cst_81 : f32 to vector<8x128xf32>
    %277 = arith.subf %276, %275 : vector<8x128xf32>
    %278 = arith.mulf %267, %277 : vector<8x128xf32>
    %cst_82 = arith.constant -1.000000e+06 : f32
    %279 = vector.broadcast %cst_82 : f32 to vector<8x128xf32>
    %280 = arith.select %271, %279, %278 : vector<8x128xi1>, vector<8x128xf32>
    %cst_83 = arith.constant -1.000000e+05 : f32
    %281 = vector.broadcast %cst_83 : f32 to vector<8x128xf32>
    %282 = arith.select %8, %281, %280 : vector<8x128xi1>, vector<8x128xf32>
    %cst_84 = arith.constant dense<0xFF800000> : vector<8xf32>
    %283 = vector.multi_reduction <maximumf>, %282, %cst_84 [1] : vector<8x128xf32> to vector<8xf32>
    %284 = vector.shape_cast %283 : vector<8xf32> to vector<8x1xf32>
    %285 = vector.broadcast %284 : vector<8x1xf32> to vector<8x128xf32>
    %286 = arith.cmpf oeq, %282, %285 : vector<8x128xf32>
    %c128_i32_85 = arith.constant 128 : i32
    %287 = vector.broadcast %c128_i32_85 : i32 to vector<8x128xi32>
    %288 = arith.select %286, %6, %287 : vector<8x128xi1>, vector<8x128xi32>
    %cst_86 = arith.constant dense<2147483647> : vector<8xi32>
    %289 = vector.multi_reduction <minsi>, %288, %cst_86 [1] : vector<8x128xi32> to vector<8xi32>
    %290 = vector.shape_cast %289 : vector<8xi32> to vector<8x1xi32>
    %291 = vector.broadcast %290 : vector<8x1xi32> to vector<8x128xi32>
    %292 = arith.cmpi eq, %6, %291 : vector<8x128xi32>
    %293 = arith.andi %292, %9 : vector<8x128xi1>
    %294 = arith.subf %259, %267 : vector<8x128xf32>
    %295 = arith.select %293, %294, %259 : vector<8x128xi1>, vector<8x128xf32>
    %296 = vector.broadcast %c7_i32 : i32 to vector<8x8xi32>
    %297 = arith.cmpi eq, %10, %296 : vector<8x8xi32>
    %298 = vector.shape_cast %290 : vector<8x1xi32> to vector<8x1xi32>
    %299 = vector.broadcast %298 : vector<8x1xi32> to vector<8x8xi32>
    %300 = arith.select %297, %299, %264 : vector<8x8xi1>, vector<8x8xi32>
    %c8_i32 = arith.constant 8 : i32
    %c0_87 = arith.constant 0 : index
    %c0_88 = arith.constant 0 : index
    %301 = vector.load %arg6[%c0_87, %c0_88] : memref<8x128xf32, #tpu.memory_space<vmem>>, vector<8x128xf32>
    tpu.vector_store %arg6[%c0_87, %c0_88], %295 {strides = array<i32>} : memref<8x128xf32, #tpu.memory_space<vmem>>, vector<8x128xf32>,
    %c0_89 = arith.constant 0 : index
    %c0_90 = arith.constant 0 : index
    %302 = vector.load %arg4[%c0_89, %c0_90] : memref<8x8xi32, #tpu.memory_space<vmem>>, vector<8x8xi32>
    tpu.vector_store %arg4[%c0_89, %c0_90], %300 {strides = array<i32>} : memref<8x8xi32, #tpu.memory_space<vmem>>, vector<8x8xi32>,
    %c0_i32_91 = arith.constant 0 : i32
    %303 = arith.cmpi eq, %arg1, %c0_i32_91 : i32
    %304 = arith.extui %303 : i1 to i32
    %c0_i32_92 = arith.constant 0 : i32
    %305 = arith.cmpi ne, %304, %c0_i32_92 : i32
    scf.if %305 {
      %306 = arith.subf %0, %295 : vector<8x128xf32>
      %cst_93 = arith.constant dense<0.000000e+00> : vector<8xf32>
      %307 = vector.multi_reduction <add>, %306, %cst_93 [1] : vector<8x128xf32> to vector<8xf32>
      %308 = vector.shape_cast %307 : vector<8xf32> to vector<8x1xf32>
      %cst_94 = arith.constant 0.000000e+00 : f32
      %309 = vector.broadcast %cst_94 : f32 to vector<8x1xf32>
      %310 = arith.subf %309, %308 : vector<8x1xf32>
      %c0_95 = arith.constant 0 : index
      %c0_96 = arith.constant 0 : index
      %311 = vector.load %arg5[%c0_95, %c0_96] : memref<8x1xf32, #tpu.memory_space<vmem>>, vector<8x1xf32>
      tpu.vector_store %arg5[%c0_95, %c0_96], %310 {strides = array<i32>} : memref<8x1xf32, #tpu.memory_space<vmem>>, vector<8x1xf32>,
    } else {
    }
    return
  }
  func.func @transform_0(%arg0: i32, %arg1: i32) -> (i32, i32, i32) {
    %c0_i32 = arith.constant 0 : i32
    %c0_i32_0 = arith.constant 0 : i32
    return %arg1, %arg0, %c0_i32 : i32, i32, i32
  }
  func.func @transform_1(%arg0: i32, %arg1: i32) -> (i32, i32) {
    %c0_i32 = arith.constant 0 : i32
    %c0_i32_0 = arith.constant 0 : i32
    return %arg0, %c0_i32 : i32, i32
  }
  func.func @transform_2(%arg0: i32, %arg1: i32) -> (i32, i32) {
    %c0_i32 = arith.constant 0 : i32
    return %arg0, %arg1 : i32, i32
  }
  func.func @transform_3(%arg0: i32, %arg1: i32) -> (i32, i32) {
    %c0_i32 = arith.constant 0 : i32
    %c0_i32_0 = arith.constant 0 : i32
    return %arg0, %c0_i32 : i32, i32
  }
}

</mosaic_0001>

<llo_original>
// kernel: tpu_custom_call.1
$region0: #{tpu_custom_call.1}
  #allocation0 [shape = 'u32[]', space=smem, size = 0x4, offset = 0x4, fixed_abs, tag = 'smem constant byte address 0x4 - core index']
  #allocation1 [shape = 'u32[144,128]{1,0:T(1,128)}', space=vmem, size = 0x12000, scoped, tag = 'internal scratch']
  #allocation2 [shape = 'f32[8,128]{1,0:T(8,128)}', space=vmem, size = 0x1000, scoped, tag = 'scratch operand']
  %s0 = inlined_call_operand.hbm [shape: f32[8,8,128], index: 0, kind: input, shape index: {}]
  %s1 = inlined_call_operand.hbm [shape: f32[8,128], index: 1, kind: input, shape index: {}]
  %s2 = inlined_call_operand.hbm [shape: s32[8,8], index: 2, kind: output, shape index: {0}]
  %s3 = inlined_call_operand.vmem [shape: f32[8,1], index: 3, kind: output, shape index: {1}]
  %4 = xla_tuple %s2, %s3
  %s5 = sld [smem:[#allocation0]]
  $region42: #{tpu_custom_call.1} parent=0
    _
  %s7 = ssub.s32 1, %s5
  %s8 = scalar_select 0, %s7, %s5
  $region1: #{tpu_custom_call.1} parent=0
    #allocation3 [shape = 'u8[32768]{0}', space=vmem, size = 0x8000, scoped, tag = 'input window, operand 0, single buffered']
    #allocation4 [shape = 's32[1]{0}', space=sflag, size = 0x4, scoped, tag = 'scoped memory for tpu_custom_call.1']
    #allocation5 [shape = 's32[1]{0}', space=sflag, size = 0x4, scoped, tag = 'scoped memory for tpu_custom_call.1']
    #allocation6 [shape = 'u8[4096]{0}', space=vmem, size = 0x1000, scoped, tag = 'input window, operand 1, single buffered']
    #allocation7 [shape = 's32[1]{0}', space=sflag, size = 0x4, scoped, tag = 'scoped memory for tpu_custom_call.1']
    #allocation8 [shape = 'u8[4096]{0}', space=vmem, size = 0x1000, scoped, tag = 'output window, operand 0, single buffered']
    %9 = vsyncpa [#allocation4], 0
    %10 = vsyncpa [#allocation7], 0
    %11 = vsyncpa [#allocation5], 0
    // Predicated region
    $region2: #{tpu_custom_call.1} parent=1 // pred_check
      _
    $region3: #{tpu_custom_call.1} parent=1 // pred_check_branch
      %13 = sbr.rel (0) target = $region5
    $region4: #{tpu_custom_call.1} parent=1 // pred_region
      %s15 = ssub.s32 1024, 1024
      %16 = vsyncadd [#allocation4], %s15
      %s17 = sshll.u32 [#allocation3], 4
      %s18 = int_to_ptr.vmem [resolvable:$true] %s17
      %23 = dma.hbm_to_vmem [thread:$0]  %s0, 1024, %s18, [#allocation4], 128, 128, 8
    $region5: #{tpu_custom_call.1} parent=1 // pred_fallthru
      _
    // Predicated region
    $region6: #{tpu_custom_call.1} parent=1 // pred_check
      _
    $region7: #{tpu_custom_call.1} parent=1 // pred_check_branch
      %25 = sbr.rel (0) target = $region9
    $region8: #{tpu_custom_call.1} parent=1 // pred_region
      %s27 = ssub.s32 128, 128
      %28 = vsyncadd [#allocation7], %s27
      %s30 = sshll.u32 [#allocation6], 4
      %s31 = int_to_ptr.vmem [resolvable:$true] %s30
      %33 = dma.hbm_to_vmem [thread:$0]  %s1, 128, %s31, [#allocation7]
    $region9: #{tpu_custom_call.1} parent=1 // pred_fallthru
      _
    // Predicated region
    $region10: #{tpu_custom_call.1} parent=1 // pred_check
      _
    $region11: #{tpu_custom_call.1} parent=1 // pred_check_branch
      %35 = sbr.rel (0) target = $region13
    $region12: #{tpu_custom_call.1} parent=1 // pred_region
      %36 = dma.done [#allocation4], 1024
    $region13: #{tpu_custom_call.1} parent=1 // pred_fallthru
      _
    // Predicated region
    $region14: #{tpu_custom_call.1} parent=1 // pred_check
      _
    $region15: #{tpu_custom_call.1} parent=1 // pred_check_branch
      %38 = sbr.rel (0) target = $region17
    $region16: #{tpu_custom_call.1} parent=1 // pred_region
      %39 = dma.done [#allocation7], 128
    $region17: #{tpu_custom_call.1} parent=1 // pred_fallthru
      _
    %v40 = vld [vmem:[#allocation6] sm:$0xff]
    %p41 = scmp.eq.s32.totalorder 0, 0
    // Predicated region
    $region18: #{tpu_custom_call.1} parent=1 // pred_check
      %p42 = pneg %p41
    $region19: #{tpu_custom_call.1} parent=1 // pred_check_branch
      %44 = sbr.rel (%p42) target = $region21
    $region20: #{tpu_custom_call.1} parent=1 // pred_region
      %45 = vst [vmem:[#allocation2] sm:$0xff] %v40
    $region21: #{tpu_custom_call.1} parent=1 // pred_fallthru
      _
    %v46 = vrcp.pop %v40
    %v47 = vmul.f32 1.0, %v46
    %v48 = vlaneseq
    %v49 = vand.u32 %v48, 127
    %vm50 = vcmp.eq.s32.totalorder %v49, 0
    %vm51 = vmxor %vm50, 1
    %v52 = vld [vmem:[#allocation2] sm:$0xff]
    %v53 = vld [vmem:[#allocation3] sm:$0xff]
    %vm54 = vcmp.le.f32.partialorder %v53, 0.0
    %vm55 = vcmp.gt.f32.partialorder %v53, %v52
    %vm56 = vmor %vm54, %vm55
    %v57 = vmul.f32 %v52, %v47
    %v58 = vsub.f32 0.0, %v57
    %v59 = vmul.f32 %v58, 1.442695
    %v60 = vpow.pop %v59
    %v61 = vsub.f32 1.0, %v60
    %v62 = vmul.f32 %v53, %v61
    %v63 = vsel %vm56, -1000000.0, %v62
    %v64 = vsel %vm50, -100000.0, %v63
    %65 = vmax.xlane.f32.xlu0 %v64
    %v66 = vpop.xlane.xlu0 %65
    %vm67 = vcmp.eq.f32.partialorder %v64, %v66
    %v68 = vsel %vm67, %v49, 128
    %v69 = vand.u32 %v68, 65535
    %v70 = vshra.s32 %v68, 16
    %v71 = vcvt.s32.f32 %v69
    %v72 = vcvt.s32.f32 %v70
    %73 = vmin.xlane.f32.xlu0 %v72
    %v74 = vpop.xlane.xlu0 %73
    %vm75 = vcmp.eq.f32.partialorder %v72, %v74
    %v76 = vsel %vm75, %v71, inf
    %77 = vmin.xlane.f32.xlu0 %v76
    %v78 = vpop.xlane.xlu0 %77
    %v79 = vcvt.f32.s32 %v78
    %v80 = vcvt.f32.s32 %v74
    %v81 = vshll.u32 %v80, 16
    %v82 = vadd.s32 %v81, %v79
    %vm83 = vcmp.eq.s32.totalorder %v49, %v82
    %vm84 = vmand %vm83, %vm51
    %v85 = vsub.f32 %v52, %v53
    %v86 = vsel %vm84, %v85, %v52
    %v87 = vsel %vm50, %v82, 0
    %s88 = scalar_lea.vmem [#allocation3], 8
    %v89 = vld [vmem:[%s88] sm:$0xff]
    %vm90 = vcmp.le.f32.partialorder %v89, 0.0
    %vm91 = vcmp.gt.f32.partialorder %v89, %v86
    %vm92 = vmor %vm90, %vm91
    %v93 = vmul.f32 %v86, %v47
    %v94 = vsub.f32 0.0, %v93
    %v95 = vmul.f32 %v94, 1.442695
    %v96 = vpow.pop %v95
    %v97 = vsub.f32 1.0, %v96
    %v98 = vmul.f32 %v89, %v97
    %v99 = vsel %vm92, -1000000.0, %v98
    %v100 = vsel %vm50, -100000.0, %v99
    %101 = vmax.xlane.f32.xlu0 %v100
    %v102 = vpop.xlane.xlu0 %101
    %vm103 = vcmp.eq.f32.partialorder %v100, %v102
    %v104 = vsel %vm103, %v49, 128
    %v105 = vand.u32 %v104, 65535
    %v106 = vshra.s32 %v104, 16
    %v107 = vcvt.s32.f32 %v105
    %v108 = vcvt.s32.f32 %v106
    %109 = vmin.xlane.f32.xlu0 %v108
    %v110 = vpop.xlane.xlu0 %109
    %vm111 = vcmp.eq.f32.partialorder %v108, %v110
    %v112 = vsel %vm111, %v107, inf
    %113 = vmin.xlane.f32.xlu0 %v112
    %v114 = vpop.xlane.xlu0 %113
    %v115 = vcvt.f32.s32 %v114
    %v116 = vcvt.f32.s32 %v110
    %v117 = vshll.u32 %v116, 16
    %v118 = vadd.s32 %v117, %v115
    %vm119 = vcmp.eq.s32.totalorder %v49, %v118
    %vm120 = vmand %vm119, %vm51
    %v121 = vsub.f32 %v86, %v89
    %v122 = vsel %vm120, %v121, %v86
    %vm123 = vcmp.eq.s32.totalorder %v49, 1
    %v124 = vsel %vm123, %v118, %v87
    %s125 = scalar_lea.vmem [#allocation3], 16
    %v126 = vld [vmem:[%s125] sm:$0xff]
    %vm127 = vcmp.le.f32.partialorder %v126, 0.0
    %vm128 = vcmp.gt.f32.partialorder %v126, %v122
    %vm129 = vmor %vm127, %vm128
    %v130 = vmul.f32 %v122, %v47
    %v131 = vsub.f32 0.0, %v130
    %v132 = vmul.f32 %v131, 1.442695
    %v133 = vpow.pop %v132
    %v134 = vsub.f32 1.0, %v133
    %v135 = vmul.f32 %v126, %v134
    %v136 = vsel %vm129, -1000000.0, %v135
    %v137 = vsel %vm50, -100000.0, %v136
    %138 = vmax.xlane.f32.xlu0 %v137
    %v139 = vpop.xlane.xlu0 %138
    %vm140 = vcmp.eq.f32.partialorder %v137, %v139
    %v141 = vsel %vm140, %v49, 128
    %v142 = vand.u32 %v141, 65535
    %v143 = vshra.s32 %v141, 16
    %v144 = vcvt.s32.f32 %v142
    %v145 = vcvt.s32.f32 %v143
    %146 = vmin.xlane.f32.xlu0 %v145
    %v147 = vpop.xlane.xlu0 %146
    %vm148 = vcmp.eq.f32.partialorder %v145, %v147
    %v149 = vsel %vm148, %v144, inf
    %150 = vmin.xlane.f32.xlu0 %v149
    %v151 = vpop.xlane.xlu0 %150
    %v152 = vcvt.f32.s32 %v151
    %v153 = vcvt.f32.s32 %v147
    %v154 = vshll.u32 %v153, 16
    %v155 = vadd.s32 %v154, %v152
    %vm156 = vcmp.eq.s32.totalorder %v49, %v155
    %vm157 = vmand %vm156, %vm51
    %v158 = vsub.f32 %v122, %v126
    %v159 = vsel %vm157, %v158, %v122
    %vm160 = vcmp.eq.s32.totalorder %v49, 2
    %v161 = vsel %vm160, %v155, %v124
    %s162 = scalar_lea.vmem [#allocation3], 24
    %v163 = vld [vmem:[%s162] sm:$0xff]
    %vm164 = vcmp.le.f32.partialorder %v163, 0.0
    %vm165 = vcmp.gt.f32.partialorder %v163, %v159
    %vm166 = vmor %vm164, %vm165
    %v167 = vmul.f32 %v159, %v47
    %v168 = vsub.f32 0.0, %v167
    %v169 = vmul.f32 %v168, 1.442695
    %v170 = vpow.pop %v169
    %v171 = vsub.f32 1.0, %v170
    %v172 = vmul.f32 %v163, %v171
    %v173 = vsel %vm166, -1000000.0, %v172
    %v174 = vsel %vm50, -100000.0, %v173
    %175 = vmax.xlane.f32.xlu0 %v174
    %v176 = vpop.xlane.xlu0 %175
    %vm177 = vcmp.eq.f32.partialorder %v174, %v176
    %v178 = vsel %vm177, %v49, 128
    %v179 = vand.u32 %v178, 65535
    %v180 = vshra.s32 %v178, 16
    %v181 = vcvt.s32.f32 %v179
    %v182 = vcvt.s32.f32 %v180
    %183 = vmin.xlane.f32.xlu0 %v182
    %v184 = vpop.xlane.xlu0 %183
    %vm185 = vcmp.eq.f32.partialorder %v182, %v184
    %v186 = vsel %vm185, %v181, inf
    %187 = vmin.xlane.f32.xlu0 %v186
    %v188 = vpop.xlane.xlu0 %187
    %v189 = vcvt.f32.s32 %v188
    %v190 = vcvt.f32.s32 %v184
    %v191 = vshll.u32 %v190, 16
    %v192 = vadd.s32 %v191, %v189
    %vm193 = vcmp.eq.s32.totalorder %v49, %v192
    %vm194 = vmand %vm193, %vm51
    %v195 = vsub.f32 %v159, %v163
    %v196 = vsel %vm194, %v195, %v159
    %vm197 = vcmp.eq.s32.totalorder %v49, 3
    %v198 = vsel %vm197, %v192, %v161
    %s199 = scalar_lea.vmem [#allocation3], 32
    %v200 = vld [vmem:[%s199] sm:$0xff]
    %vm201 = vcmp.le.f32.partialorder %v200, 0.0
    %vm202 = vcmp.gt.f32.partialorder %v200, %v196
    %vm203 = vmor %vm201, %vm202
    %v204 = vmul.f32 %v196, %v47
    %v205 = vsub.f32 0.0, %v204
    %v206 = vmul.f32 %v205, 1.442695
    %v207 = vpow.pop %v206
    %v208 = vsub.f32 1.0, %v207
    %v209 = vmul.f32 %v200, %v208
    %v210 = vsel %vm203, -1000000.0, %v209
    %v211 = vsel %vm50, -100000.0, %v210
    %212 = vmax.xlane.f32.xlu0 %v211
    %v213 = vpop.xlane.xlu0 %212
    %vm214 = vcmp.eq.f32.partialorder %v211, %v213
    %v215 = vsel %vm214, %v49, 128
    %v216 = vand.u32 %v215, 65535
    %v217 = vshra.s32 %v215, 16
    %v218 = vcvt.s32.f32 %v216
    %v219 = vcvt.s32.f32 %v217
    %220 = vmin.xlane.f32.xlu0 %v219
    %v221 = vpop.xlane.xlu0 %220
    %vm222 = vcmp.eq.f32.partialorder %v219, %v221
    %v223 = vsel %vm222, %v218, inf
    %224 = vmin.xlane.f32.xlu0 %v223
    %v225 = vpop.xlane.xlu0 %224
    %v226 = vcvt.f32.s32 %v225
    %v227 = vcvt.f32.s32 %v221
    %v228 = vshll.u32 %v227, 16
    %v229 = vadd.s32 %v228, %v226
    %vm230 = vcmp.eq.s32.totalorder %v49, %v229
    %vm231 = vmand %vm230, %vm51
    %v232 = vsub.f32 %v196, %v200
    %v233 = vsel %vm231, %v232, %v196
    %vm234 = vcmp.eq.s32.totalorder %v49, 4
    %v235 = vsel %vm234, %v229, %v198
    %s236 = scalar_lea.vmem [#allocation3], 40
    %v237 = vld [vmem:[%s236] sm:$0xff]
    %vm238 = vcmp.le.f32.partialorder %v237, 0.0
    %vm239 = vcmp.gt.f32.partialorder %v237, %v233
    %vm240 = vmor %vm238, %vm239
    %v241 = vmul.f32 %v233, %v47
    %v242 = vsub.f32 0.0, %v241
    %v243 = vmul.f32 %v242, 1.442695
    %v244 = vpow.pop %v243
    %v245 = vsub.f32 1.0, %v244
    %v246 = vmul.f32 %v237, %v245
    %v247 = vsel %vm240, -1000000.0, %v246
    %v248 = vsel %vm50, -100000.0, %v247
    %249 = vmax.xlane.f32.xlu0 %v248
    %v250 = vpop.xlane.xlu0 %249
    %vm251 = vcmp.eq.f32.partialorder %v248, %v250
    %v252 = vsel %vm251, %v49, 128
    %v253 = vand.u32 %v252, 65535
    %v254 = vshra.s32 %v252, 16
    %v255 = vcvt.s32.f32 %v253
    %v256 = vcvt.s32.f32 %v254
    %257 = vmin.xlane.f32.xlu0 %v256
    %v258 = vpop.xlane.xlu0 %257
    %vm259 = vcmp.eq.f32.partialorder %v256, %v258
    %v260 = vsel %vm259, %v255, inf
    %261 = vmin.xlane.f32.xlu0 %v260
    %v262 = vpop.xlane.xlu0 %261
    %v263 = vcvt.f32.s32 %v262
    %v264 = vcvt.f32.s32 %v258
    %v265 = vshll.u32 %v264, 16
    %v266 = vadd.s32 %v265, %v263
    %vm267 = vcmp.eq.s32.totalorder %v49, %v266
    %vm268 = vmand %vm267, %vm51
    %v269 = vsub.f32 %v233, %v237
    %v270 = vsel %vm268, %v269, %v233
    %vm271 = vcmp.eq.s32.totalorder %v49, 5
    %v272 = vsel %vm271, %v266, %v235
    %s273 = scalar_lea.vmem [#allocation3], 48
    %v274 = vld [vmem:[%s273] sm:$0xff]
    %vm275 = vcmp.le.f32.partialorder %v274, 0.0
    %vm276 = vcmp.gt.f32.partialorder %v274, %v270
    %vm277 = vmor %vm275, %vm276
    %v278 = vmul.f32 %v270, %v47
    %v279 = vsub.f32 0.0, %v278
    %v280 = vmul.f32 %v279, 1.442695
    %v281 = vpow.pop %v280
    %v282 = vsub.f32 1.0, %v281
    %v283 = vmul.f32 %v274, %v282
    %v284 = vsel %vm277, -1000000.0, %v283
    %v285 = vsel %vm50, -100000.0, %v284
    %286 = vmax.xlane.f32.xlu0 %v285
    %v287 = vpop.xlane.xlu0 %286
    %vm288 = vcmp.eq.f32.partialorder %v285, %v287
    %v289 = vsel %vm288, %v49, 128
    %v290 = vand.u32 %v289, 65535
    %v291 = vshra.s32 %v289, 16
    %v292 = vcvt.s32.f32 %v290
    %v293 = vcvt.s32.f32 %v291
    %294 = vmin.xlane.f32.xlu0 %v293
    %v295 = vpop.xlane.xlu0 %294
    %vm296 = vcmp.eq.f32.partialorder %v293, %v295
    %v297 = vsel %vm296, %v292, inf
    %298 = vmin.xlane.f32.xlu0 %v297
    %v299 = vpop.xlane.xlu0 %298
    %v300 = vcvt.f32.s32 %v299
    %v301 = vcvt.f32.s32 %v295
    %v302 = vshll.u32 %v301, 16
    %v303 = vadd.s32 %v302, %v300
    %vm304 = vcmp.eq.s32.totalorder %v49, %v303
    %vm305 = vmand %vm304, %vm51
    %v306 = vsub.f32 %v270, %v274
    %v307 = vsel %vm305, %v306, %v270
    %vm308 = vcmp.eq.s32.totalorder %v49, 6
    %v309 = vsel %vm308, %v303, %v272
    %s310 = scalar_lea.vmem [#allocation3], 56
    %v311 = vld [vmem:[%s310] sm:$0xff]
    %vm312 = vcmp.le.f32.partialorder %v311, 0.0
    %vm313 = vcmp.gt.f32.partialorder %v311, %v307
    %vm314 = vmor %vm312, %vm313
    %v315 = vmul.f32 %v307, %v47
    %v316 = vsub.f32 0.0, %v315
    %v317 = vmul.f32 %v316, 1.442695
    %v318 = vpow.pop %v317
    %v319 = vsub.f32 1.0, %v318
    %v320 = vmul.f32 %v311, %v319
    %v321 = vsel %vm314, -1000000.0, %v320
    %v322 = vsel %vm50, -100000.0, %v321
    %323 = vmax.xlane.f32.xlu0 %v322
    %v324 = vpop.xlane.xlu0 %323
    %vm325 = vcmp.eq.f32.partialorder %v322, %v324
    %v326 = vsel %vm325, %v49, 128
    %v327 = vand.u32 %v326, 65535
    %v328 = vshra.s32 %v326, 16
    %v329 = vcvt.s32.f32 %v327
    %v330 = vcvt.s32.f32 %v328
    %331 = vmin.xlane.f32.xlu0 %v330
    %v332 = vpop.xlane.xlu0 %331
    %vm333 = vcmp.eq.f32.partialorder %v330, %v332
    %v334 = vsel %vm333, %v329, inf
    %335 = vmin.xlane.f32.xlu0 %v334
    %v336 = vpop.xlane.xlu0 %335
    %v337 = vcvt.f32.s32 %v336
    %v338 = vcvt.f32.s32 %v332
    %v339 = vshll.u32 %v338, 16
    %v340 = vadd.s32 %v339, %v337
    %vm341 = vcmp.eq.s32.totalorder %v49, %v340
    %vm342 = vmand %vm341, %vm51
    %v343 = vsub.f32 %v307, %v311
    %v344 = vsel %vm342, %v343, %v307
    %vm345 = vcmp.eq.s32.totalorder %v49, 7
    %v346 = vsel %vm345, %v340, %v309
    %347 = vst [vmem:[#allocation2] sm:$0xff] %v344
    %vm348 = vcmask 64512
    %349 = vst.msk [vmem:[#allocation8] sm:$0xff] %vm348, %v346
    // Predicated region
    $region22: #{tpu_custom_call.1} parent=1 // pred_check
      %p350 = pneg %p41
    $region23: #{tpu_custom_call.1} parent=1 // pred_check_branch
      %352 = sbr.rel (%p350) target = $region25
    $region24: #{tpu_custom_call.1} parent=1 // pred_region
      %v353 = vsub.f32 %v40, %v344
      %354 = vadd.xlane.f32.xlu0 %v353
      %v355 = vpop.xlane.xlu0 %354
      %v356 = vsub.f32 0.0, %v355
      %vm357 = vcmask 7168
      %358 = vst.msk [vmem:[%s3] sm:$0xff] %vm357, %v356
    $region25: #{tpu_custom_call.1} parent=1 // pred_fallthru
      _
    // Predicated region
    $region26: #{tpu_custom_call.1} parent=1 // pred_check
      _
    $region27: #{tpu_custom_call.1} parent=1 // pred_check_branch
      %360 = sbr.rel (0) target = $region29
    $region28: #{tpu_custom_call.1} parent=1 // pred_region
      %s362 = ssub.s32 128, 128
      %363 = vsyncadd [#allocation5], %s362
      %s365 = sshll.u32 [#allocation8], 4
      %s366 = int_to_ptr.vmem [resolvable:$true] %s365
      %368 = dma.vmem_to_hbm [thread:$0]  %s366, 128, %s2, [#allocation5]
    $region29: #{tpu_custom_call.1} parent=1 // pred_fallthru
      _
    // Predicated region
    $region30: #{tpu_custom_call.1} parent=1 // pred_check
      _
    $region31: #{tpu_custom_call.1} parent=1 // pred_check_branch
      %370 = sbr.rel (0) target = $region33
    $region32: #{tpu_custom_call.1} parent=1 // pred_region
      _
    $region33: #{tpu_custom_call.1} parent=1 // pred_fallthru
      _
    // Predicated region
    $region34: #{tpu_custom_call.1} parent=1 // pred_check
      _
    $region35: #{tpu_custom_call.1} parent=1 // pred_check_branch
      %372 = sbr.rel (0) target = $region37
    $region36: #{tpu_custom_call.1} parent=1 // pred_region
      %373 = dma.done [#allocation5], 128
    $region37: #{tpu_custom_call.1} parent=1 // pred_fallthru
      _
    // Predicated region
    $region38: #{tpu_custom_call.1} parent=1 // pred_check
      _
    $region39: #{tpu_custom_call.1} parent=1 // pred_check_branch
      %375 = sbr.rel (0) target = $region41
    $region40: #{tpu_custom_call.1} parent=1 // pred_region
      _
    $region41: #{tpu_custom_call.1} parent=1 // pred_fallthru
      _
    %376 = vsyncpa [#allocation4], 1
    %377 = vsyncpa [#allocation7], 1
    %378 = vsyncpa [#allocation5], 1

</llo_original>
